<compile_context>
chip_gen: v5e
topology: v5e:2x2
jax: 0.10.0
libtpu: 0.0.40
codegen_flags: <defaults>
</compile_context>

<pallas_src>
import jax
import jax.numpy as jnp
from jax.experimental import pallas as pl
from jax.experimental.pallas import tpu as pltpu

IOTA = 0.5    # composite_percent
MU = 0.5      # tversky_percent
ALPHA = 0.5
BETA = 0.5
SMOOTH = 1.0

LANES = 128
SUBLANES = 8
MAX_BLOCK_ROWS = 2048   # 1 MiB per f32 input block; 2 inputs x 2 buffers = 4 MiB VMEM (fits v5e default)
NUM_SHARDS = 2          # leading "parallel" axis: 2 TCs on v7x, plain sequential loop on 1-TC chips


def _partials_kernel(x_ref, t_ref, acc_ref):
    """Accumulate per-shard (8,128) vector partials of [sum(s*t), sum(s), sum(t), sum(bce)]."""
    i = pl.program_id(1)

    @pl.when(i == 0)
    def _():
        acc_ref[...] = jnp.zeros_like(acc_ref)

    x = x_ref[...]
    t = t_ref[...]

    # double sigmoid. With u = sigmoid(x):
    #   s   = sigmoid(u) = e/(1+e),            e = exp(u)
    #   bce = -(t*log(s) + (1-t)*log(1-s)) = softplus(u) - t*u = log1p(e) - t*u
    # s is bounded in (0.62, 0.74) so torch's -100 log clamp is never active.
    u = jax.nn.sigmoid(x)
    e = jnp.exp(u)
    s = e / (1.0 + e)
    bce = jnp.log1p(e) - t * u
    st = s * t

    def fold(v):
        # (block_rows, 128) -> (8, 128) sublane-group partial sums: pure VPU adds over the
        # leading (untiled) axis. The single cross-lane reduction happens once, in the wrapper.
        return jnp.sum(v.reshape(-1, SUBLANES, LANES), axis=0)

    acc_ref[0] += fold(st)    # TP / intersection
    acc_ref[1] += fold(s)     # sum(sigmoid)
    acc_ref[2] += fold(t)     # sum(target)
    acc_ref[3] += fold(bce)   # sum(BCE terms)


def composite_tversky(inputs, targets):
    n = inputs.size
    xf = inputs.reshape(-1).astype(jnp.float32)
    tf = targets.reshape(-1).astype(jnp.float32)

    rows_needed = pl.cdiv(n, LANES)
    block_rows = min(
        MAX_BLOCK_ROWS,
        max(SUBLANES, pl.cdiv(rows_needed, NUM_SHARDS * SUBLANES) * SUBLANES),
    )
    per_block = block_rows * LANES
    blocks_per_shard = pl.cdiv(n, NUM_SHARDS * per_block)
    n_padded = NUM_SHARDS * blocks_per_shard * per_block

    if n_padded != n:
        # zero padding; its constant contribution is subtracted analytically below
        xf = jnp.pad(xf, (0, n_padded - n))
        tf = jnp.pad(tf, (0, n_padded - n))
    xf = xf.reshape(-1, LANES)
    tf = tf.reshape(-1, LANES)

    acc = pl.pallas_call(
        _partials_kernel,
        out_shape=jax.ShapeDtypeStruct((NUM_SHARDS * 4, SUBLANES, LANES), jnp.float32),
        grid_spec=pltpu.PrefetchScalarGridSpec(
            num_scalar_prefetch=0,
            grid=(NUM_SHARDS, blocks_per_shard),
            in_specs=[
                pl.BlockSpec((block_rows, LANES),
                             lambda p, i: (p * blocks_per_shard + i, 0)),
                pl.BlockSpec((block_rows, LANES),
                             lambda p, i: (p * blocks_per_shard + i, 0)),
            ],
            out_specs=pl.BlockSpec((4, SUBLANES, LANES), lambda p, i: (p, 0, 0)),
        ),
        compiler_params=pltpu.CompilerParams(
            dimension_semantics=("parallel", "arbitrary")),
    )(xf, tf)

    # combine per-shard / per-lane partials (tiny: NUM_SHARDS*4*8*128 floats)
    sums = acc.reshape(NUM_SHARDS, 4, SUBLANES * LANES).sum(axis=(0, 2))
    tp, s_sum, t_sum, bce_sum = sums[0], sums[1], sums[2], sums[3]

    # remove zero-padding contribution: padded element has x=0, t=0 => st=0, t=0, s=s0, bce=bce0,
    # computed with the same f32 formulas as the in-kernel per-element path (exact reciprocal).
    pad = jnp.float32(n_padded - n)
    u0 = jax.nn.sigmoid(jnp.float32(0.0))
    e0 = jnp.exp(u0)
    s0 = e0 / (1.0 + e0)
    bce0 = jnp.log1p(e0)
    s_sum = s_sum - pad * s0
    bce_sum = bce_sum - pad * bce0

    fp = s_sum - tp
    fn = t_sum - tp
    tversky_loss = 1.0 - (tp + SMOOTH) / (tp + ALPHA * fp + BETA * fn + SMOOTH)
    dice_loss = 1.0 - (2.0 * tp + SMOOTH) / (s_sum + t_sum + SMOOTH)
    bce_mean = bce_sum / jnp.float32(n)
    composite_loss = bce_mean + dice_loss
    return tversky_loss * MU + composite_loss * IOTA


def _reference(inputs, targets):
    s = jax.nn.sigmoid(jax.nn.sigmoid(inputs.astype(jnp.float32))).reshape(-1)
    t = targets.astype(jnp.float32).reshape(-1)
    tp = jnp.sum(s * t)
    fp = jnp.sum((1.0 - t) * s)
    fn = jnp.sum(t * (1.0 - s))
    tversky_loss = 1.0 - (tp + SMOOTH) / (tp + ALPHA * fp + BETA * fn + SMOOTH)
    dice_loss = 1.0 - (2.0 * tp + SMOOTH) / (jnp.sum(s) + jnp.sum(t) + SMOOTH)
    bce = jnp.mean(-(t * jnp.log(s) + (1.0 - t) * jnp.log(1.0 - s)))
    return tversky_loss * MU + (bce + dice_loss) * IOTA


if __name__ == "__main__":
    key = jax.random.PRNGKey(0)
    k1, k2 = jax.random.split(key)
    # NCHW logits and binary targets, as the loss would see them in segmentation
    x = jax.random.normal(k1, (2, 4, 16, 16), dtype=jnp.float32)
    target = jax.random.bernoulli(k2, p=0.3, shape=(2, 4, 16, 16)).astype(jnp.float32)

    loss = composite_tversky(x, target)
    jax.block_until_ready(loss)

    ref = _reference(x, target)
    assert jnp.allclose(loss, ref, rtol=1e-5, atol=1e-5), (loss, ref)
    print("KERNEL_OK")
</pallas_src>

<mosaic_0001>
module attributes {stable_mosaic.version = 11 : i64} {
  func.func @_partials_kernel(%arg0: i32, %arg1: i32, %arg2: memref<8x128xf32, #tpu.memory_space<vmem>>, %arg3: memref<8x128xf32, #tpu.memory_space<vmem>>, %arg4: memref<4x8x128xf32, #tpu.memory_space<vmem>>) attributes {dimension_semantics = [#tpu.dimension_semantics<parallel>, #tpu.dimension_semantics<arbitrary>], iteration_bounds = array<i64: 2, 1>, scalar_prefetch = 0 : i64, scratch_operands = 0 : i64, tpu.core_type = #tpu.core_type<tc>, window_params = [{transform_indices = @transform_0, window_bounds = array<i64: 8, 128>}, {transform_indices = @transform_1, window_bounds = array<i64: 8, 128>}, {transform_indices = @transform_2, window_bounds = array<i64: 4, 8, 128>}]} {
    %c0_i32 = arith.constant 0 : i32
    %0 = arith.cmpi eq, %arg1, %c0_i32 : i32
    %1 = arith.extui %0 : i1 to i32
    %c0_i32_0 = arith.constant 0 : i32
    %2 = arith.cmpi ne, %1, %c0_i32_0 : i32
    scf.if %2 {
      %cst_30 = arith.constant 0.000000e+00 : f32
      %50 = vector.broadcast %cst_30 : f32 to vector<4x8x128xf32>
      %c0_31 = arith.constant 0 : index
      %c0_32 = arith.constant 0 : index
      %c0_33 = arith.constant 0 : index
      %51 = vector.load %arg4[%c0_31, %c0_32, %c0_33] : memref<4x8x128xf32, #tpu.memory_space<vmem>>, vector<4x8x128xf32>
      tpu.vector_store %arg4[%c0_31, %c0_32, %c0_33], %50 {strides = array<i32>} : memref<4x8x128xf32, #tpu.memory_space<vmem>>, vector<4x8x128xf32>,
    } else {
    }
    %c0 = arith.constant 0 : index
    %c0_1 = arith.constant 0 : index
    %3 = vector.load %arg2[%c0, %c0_1] : memref<8x128xf32, #tpu.memory_space<vmem>>, vector<8x128xf32>
    %c0_2 = arith.constant 0 : index
    %c0_3 = arith.constant 0 : index
    %4 = vector.load %arg3[%c0_2, %c0_3] : memref<8x128xf32, #tpu.memory_space<vmem>>, vector<8x128xf32>
    %5 = arith.negf %3 : vector<8x128xf32>
    %6 = math.exp %5 : vector<8x128xf32>
    %cst = arith.constant 1.000000e+00 : f32
    %7 = vector.broadcast %cst : f32 to vector<8x128xf32>
    %8 = arith.addf %7, %6 : vector<8x128xf32>
    %9 = arith.divf %7, %8 : vector<8x128xf32>
    %10 = math.exp %9 : vector<8x128xf32>
    %cst_4 = arith.constant 1.000000e+00 : f32
    %11 = vector.broadcast %cst_4 : f32 to vector<8x128xf32>
    %12 = arith.addf %11, %10 : vector<8x128xf32>
    %13 = arith.divf %10, %12 : vector<8x128xf32>
    %14 = math.log1p %10 : vector<8x128xf32>
    %15 = arith.mulf %4, %9 : vector<8x128xf32>
    %16 = arith.subf %14, %15 : vector<8x128xf32>
    %17 = arith.mulf %13, %4 : vector<8x128xf32>
    %c0_5 = arith.constant 0 : index
    %c0_6 = arith.constant 0 : index
    %c0_7 = arith.constant 0 : index
    %18 = vector.load %arg4[%c0_5, %c0_6, %c0_7] : memref<4x8x128xf32, #tpu.memory_space<vmem>>, vector<1x8x128xf32>
    %19 = vector.shape_cast %18 : vector<1x8x128xf32> to vector<8x128xf32>
    %20 = vector.shape_cast %17 : vector<8x128xf32> to vector<1x8x128xf32>
    %cst_8 = arith.constant dense<0.000000e+00> : vector<8x128xf32>
    %21 = vector.multi_reduction <add>, %20, %cst_8 [0] : vector<1x8x128xf32> to vector<8x128xf32>
    %22 = arith.addf %19, %21 : vector<8x128xf32>
    %c0_9 = arith.constant 0 : index
    %c0_10 = arith.constant 0 : index
    %c0_11 = arith.constant 0 : index
    %23 = vector.load %arg4[%c0_9, %c0_10, %c0_11] : memref<4x8x128xf32, #tpu.memory_space<vmem>>, vector<1x8x128xf32>
    %24 = vector.shape_cast %23 : vector<1x8x128xf32> to vector<8x128xf32>
    %25 = vector.shape_cast %22 : vector<8x128xf32> to vector<1x8x128xf32>
    tpu.vector_store %arg4[%c0_9, %c0_10, %c0_11], %25 {strides = array<i32>} : memref<4x8x128xf32, #tpu.memory_space<vmem>>, vector<1x8x128xf32>,
    %c1 = arith.constant 1 : index
    %c0_12 = arith.constant 0 : index
    %c0_13 = arith.constant 0 : index
    %26 = vector.load %arg4[%c1, %c0_12, %c0_13] : memref<4x8x128xf32, #tpu.memory_space<vmem>>, vector<1x8x128xf32>
    %27 = vector.shape_cast %26 : vector<1x8x128xf32> to vector<8x128xf32>
    %28 = vector.shape_cast %13 : vector<8x128xf32> to vector<1x8x128xf32>
    %cst_14 = arith.constant dense<0.000000e+00> : vector<8x128xf32>
    %29 = vector.multi_reduction <add>, %28, %cst_14 [0] : vector<1x8x128xf32> to vector<8x128xf32>
    %30 = arith.addf %27, %29 : vector<8x128xf32>
    %c1_15 = arith.constant 1 : index
    %c0_16 = arith.constant 0 : index
    %c0_17 = arith.constant 0 : index
    %31 = vector.load %arg4[%c1_15, %c0_16, %c0_17] : memref<4x8x128xf32, #tpu.memory_space<vmem>>, vector<1x8x128xf32>
    %32 = vector.shape_cast %31 : vector<1x8x128xf32> to vector<8x128xf32>
    %33 = vector.shape_cast %30 : vector<8x128xf32> to vector<1x8x128xf32>
    tpu.vector_store %arg4[%c1_15, %c0_16, %c0_17], %33 {strides = array<i32>} : memref<4x8x128xf32, #tpu.memory_space<vmem>>, vector<1x8x128xf32>,
    %c2 = arith.constant 2 : index
    %c0_18 = arith.constant 0 : index
    %c0_19 = arith.constant 0 : index
    %34 = vector.load %arg4[%c2, %c0_18, %c0_19] : memref<4x8x128xf32, #tpu.memory_space<vmem>>, vector<1x8x128xf32>
    %35 = vector.shape_cast %34 : vector<1x8x128xf32> to vector<8x128xf32>
    %36 = vector.shape_cast %4 : vector<8x128xf32> to vector<1x8x128xf32>
    %cst_20 = arith.constant dense<0.000000e+00> : vector<8x128xf32>
    %37 = vector.multi_reduction <add>, %36, %cst_20 [0] : vector<1x8x128xf32> to vector<8x128xf32>
    %38 = arith.addf %35, %37 : vector<8x128xf32>
    %c2_21 = arith.constant 2 : index
    %c0_22 = arith.constant 0 : index
    %c0_23 = arith.constant 0 : index
    %39 = vector.load %arg4[%c2_21, %c0_22, %c0_23] : memref<4x8x128xf32, #tpu.memory_space<vmem>>, vector<1x8x128xf32>
    %40 = vector.shape_cast %39 : vector<1x8x128xf32> to vector<8x128xf32>
    %41 = vector.shape_cast %38 : vector<8x128xf32> to vector<1x8x128xf32>
    tpu.vector_store %arg4[%c2_21, %c0_22, %c0_23], %41 {strides = array<i32>} : memref<4x8x128xf32, #tpu.memory_space<vmem>>, vector<1x8x128xf32>,
    %c3 = arith.constant 3 : index
    %c0_24 = arith.constant 0 : index
    %c0_25 = arith.constant 0 : index
    %42 = vector.load %arg4[%c3, %c0_24, %c0_25] : memref<4x8x128xf32, #tpu.memory_space<vmem>>, vector<1x8x128xf32>
    %43 = vector.shape_cast %42 : vector<1x8x128xf32> to vector<8x128xf32>
    %44 = vector.shape_cast %16 : vector<8x128xf32> to vector<1x8x128xf32>
    %cst_26 = arith.constant dense<0.000000e+00> : vector<8x128xf32>
    %45 = vector.multi_reduction <add>, %44, %cst_26 [0] : vector<1x8x128xf32> to vector<8x128xf32>
    %46 = arith.addf %43, %45 : vector<8x128xf32>
    %c3_27 = arith.constant 3 : index
    %c0_28 = arith.constant 0 : index
    %c0_29 = arith.constant 0 : index
    %47 = vector.load %arg4[%c3_27, %c0_28, %c0_29] : memref<4x8x128xf32, #tpu.memory_space<vmem>>, vector<1x8x128xf32>
    %48 = vector.shape_cast %47 : vector<1x8x128xf32> to vector<8x128xf32>
    %49 = vector.shape_cast %46 : vector<8x128xf32> to vector<1x8x128xf32>
    tpu.vector_store %arg4[%c3_27, %c0_28, %c0_29], %49 {strides = array<i32>} : memref<4x8x128xf32, #tpu.memory_space<vmem>>, vector<1x8x128xf32>,
    return
  }
  func.func @transform_0(%arg0: i32, %arg1: i32) -> (i32, i32) {
    %c1_i32 = arith.constant 1 : i32
    %0 = arith.muli %arg0, %c1_i32 : i32
    %1 = arith.addi %0, %arg1 : i32
    %c0_i32 = arith.constant 0 : i32
    %c0_i32_0 = arith.constant 0 : i32
    return %1, %c0_i32 : i32, i32
  }
  func.func @transform_1(%arg0: i32, %arg1: i32) -> (i32, i32) {
    %c1_i32 = arith.constant 1 : i32
    %0 = arith.muli %arg0, %c1_i32 : i32
    %1 = arith.addi %0, %arg1 : i32
    %c0_i32 = arith.constant 0 : i32
    %c0_i32_0 = arith.constant 0 : i32
    return %1, %c0_i32 : i32, i32
  }
  func.func @transform_2(%arg0: i32, %arg1: i32) -> (i32, i32, i32) {
    %c0_i32 = arith.constant 0 : i32
    %c0_i32_0 = arith.constant 0 : i32
    %c0_i32_1 = arith.constant 0 : i32
    return %arg0, %c0_i32, %c0_i32_0 : i32, i32, i32
  }
}

</mosaic_0001>

<llo_original>
// kernel: tpu_custom_call.1
$region0: #{tpu_custom_call.1}
  #allocation0 [shape = 'u32[]', space=smem, size = 0x4, offset = 0x4, fixed_abs, tag = 'smem constant byte address 0x4 - core index']
  #allocation1 [shape = 'u32[72,128]{1,0:T(1,128)}', space=vmem, size = 0x9000, scoped, tag = 'internal scratch']
  %s0 = inlined_call_operand.hbm [shape: f32[16,128], index: 0, kind: input, shape index: {}]
  %s1 = inlined_call_operand.hbm [shape: f32[16,128], index: 1, kind: input, shape index: {}]
  %s2 = inlined_call_operand.hbm [shape: f32[8,8,128], index: 2, kind: output, shape index: {}]
  %s3 = sld [smem:[#allocation0]]
  $region53: #{tpu_custom_call.1} parent=0
    _
  %s5 = ssub.s32 1, %s3
  %s6 = scalar_select 0, %s5, %s3
  $region1: #{tpu_custom_call.1} parent=0
    #allocation2 [shape = 'u8[8192]{0}', space=vmem, size = 0x2000, scoped, tag = 'input window, operand 0']
    #allocation3 [shape = 's32[2]{0}', space=sflag, size = 0x8, scoped, tag = 'scoped memory for tpu_custom_call.1']
    #allocation4 [shape = 's32[2]{0}', space=sflag, size = 0x8, scoped, tag = 'scoped memory for tpu_custom_call.1']
    #allocation5 [shape = 'u8[8192]{0}', space=vmem, size = 0x2000, scoped, tag = 'input window, operand 1']
    #allocation6 [shape = 's32[2]{0}', space=sflag, size = 0x8, scoped, tag = 'scoped memory for tpu_custom_call.1']
    #allocation7 [shape = 'u8[32768]{0}', space=vmem, size = 0x8000, scoped, tag = 'output window, operand 0']
    %7 = vsyncpa [#allocation3], 0
    %s8 = scalar_lea.sflag [#allocation3], 1
    %9 = vsyncpa %s8, 0
    %10 = vsyncpa [#allocation6], 0
    %s11 = scalar_lea.sflag [#allocation6], 1
    %12 = vsyncpa %s11, 0
    %13 = vsyncpa [#allocation4], 0
    %s14 = scalar_lea.sflag [#allocation4], 1
    %15 = vsyncpa %s14, 0
    loop: start=0, step=1, limit=4
    $region2: #{tpu_custom_call.1} parent=1 // loop_pre_header
      _
    $region3: #{tpu_custom_call.1} parent=1 // loop_header
      %s17 = sphi 0, %s21
      %p18 = scmp.ge.s32.totalorder %s17, 4
      %s24 = sphi 0, %s36
      %s25 = sphi 0, %s32
      %s26 = sphi 0, %s24
      %s27 = sphi 0, %s25
      %s28 = sphi 0, %s26
      %s29 = sphi 0, %s27
      %s41 = sphi 0, %s43
      %s44 = sphi 0, %s41
      %s45 = sphi 0, %s44
      %s61 = sphi 0, %s45
      %s69 = sphi 0, %s71
      %s72 = sphi 0, %s69
      %s73 = sphi 0, %s72
      %s89 = sphi 0, %s73
      %s95 = sphi 0, %s97
      %s98 = sphi 0, %s95
      %s99 = sphi 0, %s98
      %s115 = sphi 0, %s99
    $region4: #{tpu_custom_call.1} parent=1 // loop_header_branch
      %20 = sbr.rel (%p18) target = $region8
    $region5: #{tpu_custom_call.1} parent=1 // loop_body
      %s22 = ssub.s32 %s17, 1
      %s23 = ssub.s32 %s17, 2
      %s30 = sadd.s32 1, %s25
      %p31 = scmp.ge.s32.totalorder %s30, 1
      %s32 = scalar_select %p31, 0, %s30
      %s33 = sadd.s32 1, %s24
      %s34 = scalar_select %p31, %s33, %s24
      %p35 = scmp.ge.s32.totalorder %s34, 2
      %s36 = scalar_select %p35, 0, %s34
      %s37 = sadd.s32 %s24, %s25
      %s38 = sadd.s32 %s36, %s32
      %s39 = ssub.s32 %s37, %s38
      %p40 = scmp.eq.s32.totalorder %s39, 0
      %s42 = sadd.s32 %s41, 1
      %s43 = scalar_select %p40, %s41, %s42
      %p46 = pneg %p40
      %p47 = scmp.eq.s32.totalorder %s17, 1
      %p48 = por %p46, %p47
      %p49 = scmp.ne.s32.totalorder %s41, %s44
      %p50 = scmp.eq.s32.totalorder %s17, 0
      %p51 = por %p49, %p50
      %p52 = scmp.ne.s32.totalorder %s41, %s44
      %p53 = scmp.eq.s32.totalorder %s22, 1
      %p54 = por %p52, %p53
      %p55 = scmp.ne.s32.totalorder %s44, %s45
      %p56 = scmp.eq.s32.totalorder %s22, 0
      %p57 = por %p55, %p56
      %p58 = scmp.ne.s32.totalorder %s44, %s45
      %p59 = scmp.eq.s32.totalorder %s23, 1
      %p60 = por %p58, %p59
      %p62 = scmp.ne.s32.totalorder %s45, %s61
      %p63 = scmp.eq.s32.totalorder %s23, 0
      %p64 = por %p62, %p63
      %s65 = sadd.s32 %s24, %s25
      %s66 = sadd.s32 %s36, %s32
      %s67 = ssub.s32 %s65, %s66
      %p68 = scmp.eq.s32.totalorder %s67, 0
      %s70 = sadd.s32 %s69, 1
      %s71 = scalar_select %p68, %s69, %s70
      %p74 = pneg %p68
      %p75 = scmp.eq.s32.totalorder %s17, 1
      %p76 = por %p74, %p75
      %p77 = scmp.ne.s32.totalorder %s69, %s72
      %p78 = scmp.eq.s32.totalorder %s17, 0
      %p79 = por %p77, %p78
      %p80 = scmp.ne.s32.totalorder %s69, %s72
      %p81 = scmp.eq.s32.totalorder %s22, 1
      %p82 = por %p80, %p81
      %p83 = scmp.ne.s32.totalorder %s72, %s73
      %p84 = scmp.eq.s32.totalorder %s22, 0
      %p85 = por %p83, %p84
      %p86 = scmp.ne.s32.totalorder %s72, %s73
      %p87 = scmp.eq.s32.totalorder %s23, 1
      %p88 = por %p86, %p87
      %p90 = scmp.ne.s32.totalorder %s73, %s89
      %p91 = scmp.eq.s32.totalorder %s23, 0
      %p92 = por %p90, %p91
      %s93 = ssub.s32 %s24, %s36
      %p94 = scmp.eq.s32.totalorder %s93, 0
      %s96 = sadd.s32 %s95, 1
      %s97 = scalar_select %p94, %s95, %s96
      %p100 = pneg %p94
      %p101 = scmp.eq.s32.totalorder %s17, 1
      %p102 = por %p100, %p101
      %p103 = scmp.ne.s32.totalorder %s95, %s98
      %p104 = scmp.eq.s32.totalorder %s17, 0
      %p105 = por %p103, %p104
      %p106 = scmp.ne.s32.totalorder %s95, %s98
      %p107 = scmp.eq.s32.totalorder %s22, 1
      %p108 = por %p106, %p107
      %p109 = scmp.ne.s32.totalorder %s98, %s99
      %p110 = scmp.eq.s32.totalorder %s22, 0
      %p111 = por %p109, %p110
      %p112 = scmp.ne.s32.totalorder %s98, %s99
      %p113 = scmp.eq.s32.totalorder %s23, 1
      %p114 = por %p112, %p113
      %p116 = scmp.ne.s32.totalorder %s99, %s115
      %p117 = scmp.eq.s32.totalorder %s23, 0
      %p118 = por %p116, %p117
      %p119 = scmp.le.s32.totalorder 1, %s17
      %p120 = scmp.lt.s32.totalorder %s17, 3
      %p121 = pnand %p119, %p120
      %p122 = pneg %p121
      // Predicated region
      $region9: #{tpu_custom_call.1} parent=5 // pred_check
        _
      $region10: #{tpu_custom_call.1} parent=5 // pred_check_branch
        %124 = sbr.rel (%p121) target = $region12
      $region11: #{tpu_custom_call.1} parent=5 // pred_region
        %s125 = ssub.s32 %s17, 1
      $region12: #{tpu_custom_call.1} parent=5 // pred_fallthru
        _
      %p126 = scmp.lt.s32.totalorder %s17, 2
      // Predicated region
      $region13: #{tpu_custom_call.1} parent=5 // pred_check
        %p127 = pneg %p126
      $region14: #{tpu_custom_call.1} parent=5 // pred_check_branch
        %129 = sbr.rel (%p127) target = $region16
      $region15: #{tpu_custom_call.1} parent=5 // pred_region
        // Predicated region
        $region17: #{tpu_custom_call.1} parent=15 // pred_check
          %p130 = pneg %p51
        $region18: #{tpu_custom_call.1} parent=15 // pred_check_branch
          %132 = sbr.rel (%p130) target = $region20
        $region19: #{tpu_custom_call.1} parent=15 // pred_region
          %s133 = sand.u32 %s41, 1
          %s134 = scalar_lea.sflag [#allocation3], %s133
          %s135 = sand.u32 %s41, 1
          %s136 = smul.addr %s135, 8
          %s137 = scalar_lea.vmem [#allocation2], %s136
          %s138 = sadd.s32 %s24, %s25
          %140 = vsyncadd %s134, 0
          %s141 = smul.addr %s138, 8
          %s142 = scalar_lea.hbm %s0, %s141
          %s144 = sshll.u32 %s142, 4
          %s145 = int_to_ptr.hbm [resolvable:$true] %s144
          %s146 = sshll.u32 %s137, 4
          %s147 = int_to_ptr.vmem [resolvable:$true] %s146
          %149 = dma.hbm_to_vmem [thread:$0]  %s145, 128, %s147, %s134
        $region20: #{tpu_custom_call.1} parent=15 // pred_fallthru
          _
        // Predicated region
        $region21: #{tpu_custom_call.1} parent=15 // pred_check
          %p150 = pneg %p79
        $region22: #{tpu_custom_call.1} parent=15 // pred_check_branch
          %152 = sbr.rel (%p150) target = $region24
        $region23: #{tpu_custom_call.1} parent=15 // pred_region
          %s153 = sand.u32 %s69, 1
          %s154 = scalar_lea.sflag [#allocation6], %s153
          %s155 = sand.u32 %s69, 1
          %s156 = smul.addr %s155, 8
          %s157 = scalar_lea.vmem [#allocation5], %s156
          %s158 = sadd.s32 %s24, %s25
          %160 = vsyncadd %s154, 0
          %s161 = smul.addr %s158, 8
          %s162 = scalar_lea.hbm %s1, %s161
          %s164 = sshll.u32 %s162, 4
          %s165 = int_to_ptr.hbm [resolvable:$true] %s164
          %s166 = sshll.u32 %s157, 4
          %s167 = int_to_ptr.vmem [resolvable:$true] %s166
          %169 = dma.hbm_to_vmem [thread:$0]  %s165, 128, %s167, %s154
        $region24: #{tpu_custom_call.1} parent=15 // pred_fallthru
          _
      $region16: #{tpu_custom_call.1} parent=5 // pred_fallthru
        _
      %p170 = scmp.le.s32.totalorder 1, %s17
      %p171 = scmp.lt.s32.totalorder %s17, 3
      %p172 = pnand %p170, %p171
      %p173 = pneg %p172
      // Predicated region
      $region25: #{tpu_custom_call.1} parent=5 // pred_check
        _
      $region26: #{tpu_custom_call.1} parent=5 // pred_check_branch
        %175 = sbr.rel (%p172) target = $region28
      $region27: #{tpu_custom_call.1} parent=5 // pred_region
        %s176 = ssub.s32 %s17, 1
        %s177 = sand.u32 %s44, 1
        %s178 = scalar_lea.sflag [#allocation3], %s177
        %s179 = sand.u32 %s44, 1
        %s180 = smul.addr %s179, 8
        %s181 = scalar_lea.vmem [#allocation2], %s180
        // Predicated region
        $region29: #{tpu_custom_call.1} parent=27 // pred_check
          %p182 = pneg %p57
        $region30: #{tpu_custom_call.1} parent=27 // pred_check_branch
          %184 = sbr.rel (%p182) target = $region32
        $region31: #{tpu_custom_call.1} parent=27 // pred_region
          %186 = dma.done %s178, 128
        $region32: #{tpu_custom_call.1} parent=27 // pred_fallthru
          _
        %s187 = sand.u32 %s72, 1
        %s188 = scalar_lea.sflag [#allocation6], %s187
        %s189 = sand.u32 %s72, 1
        %s190 = smul.addr %s189, 8
        %s191 = scalar_lea.vmem [#allocation5], %s190
        // Predicated region
        $region33: #{tpu_custom_call.1} parent=27 // pred_check
          %p192 = pneg %p85
        $region34: #{tpu_custom_call.1} parent=27 // pred_check_branch
          %194 = sbr.rel (%p192) target = $region36
        $region35: #{tpu_custom_call.1} parent=27 // pred_region
          %196 = dma.done %s188, 128
        $region36: #{tpu_custom_call.1} parent=27 // pred_fallthru
          _
        %s197 = sand.u32 %s44, 1
        %s198 = scalar_lea.sflag [#allocation3], %s197
        %s199 = sand.u32 %s44, 1
        %s200 = smul.addr %s199, 8
        %s201 = scalar_lea.vmem [#allocation2], %s200
        %p202 = pneg %p57
        %p203 = pneg %p54
        %s204 = sand.u32 %s72, 1
        %s205 = scalar_lea.sflag [#allocation6], %s204
        %s206 = sand.u32 %s72, 1
        %s207 = smul.addr %s206, 8
        %s208 = scalar_lea.vmem [#allocation5], %s207
        %p209 = pneg %p85
        %p210 = pneg %p82
        %p211 = pneg %p111
        %p212 = pneg %p108
        %s213 = sand.u32 %s98, 1
        %s214 = scalar_lea.sflag [#allocation4], %s213
        %s215 = sand.u32 %s98, 1
        %s216 = smul.addr %s215, 32
        %s217 = scalar_lea.vmem [#allocation7], %s216
        %s218 = sadd.s32 %s26, %s27
        %s219 = sadd.s32 %s26, %s27
        %s220 = smul.u32 4, %s26
        %p221 = scmp.eq.s32.totalorder %s27, 0
        // Predicated region
        $region37: #{tpu_custom_call.1} parent=27 // pred_check
          %p222 = pneg %p221
        $region38: #{tpu_custom_call.1} parent=27 // pred_check_branch
          %224 = sbr.rel (%p222) target = $region40
        $region39: #{tpu_custom_call.1} parent=27 // pred_region
          %225 = vst [vmem:[%s217] sm:$0xff] 0.0
          %226 = vst [vmem:[%s217 + $0x8] sm:$0xff] 0.0
          %227 = vst [vmem:[%s217 + $0x10] sm:$0xff] 0.0
          %228 = vst [vmem:[%s217 + $0x18] sm:$0xff] 0.0
        $region40: #{tpu_custom_call.1} parent=27 // pred_fallthru
          _
        %v229 = vld [vmem:[%s181] sm:$0xff]
        %v230 = vld [vmem:[%s191] sm:$0xff]
        %v231 = vxor.u32 %v229, 2147483648
        %v232 = vmul.f32 %v231, 1.442695
        %v233 = vpow.pop %v232
        %v234 = vadd.f32 %v233, 1.0
        %v235 = vrcp.pop %v234
        %v236 = vmul.f32 %v234, %v235
        %v237 = vsub.f32 1.0, %v236
        %v238 = vmul.f32 %v235, %v237
        %v239 = vadd.f32 %v235, %v238
        %vm240 = vweird.f32 %v234
        %vm241 = vweird.f32 %v235
        %vm242 = vmor %vm240, %vm241
        %v243 = vsel %vm242, %v235, %v239
        %v244 = vand.u32 2147483647, %v234
        %vm245 = vcmp.eq.f32.partialorder %v244, 8.507059e+37
        %v246 = vand.u32 %v234, 2147483648
        %v247 = vor.u32 1.1754944e-38, %v246
        %v248 = vsel %vm245, %v247, %v243
        %v249 = vmul.f32 1.0, %v248
        %v250 = vmul.f32 %v249, 1.442695
        %v251 = vpow.pop %v250
        %v252 = vadd.f32 %v251, 1.0
        %v253 = vrcp.pop %v252
        %v254 = vmul.f32 %v252, %v253
        %v255 = vsub.f32 1.0, %v254
        %v256 = vmul.f32 %v253, %v255
        %v257 = vadd.f32 %v253, %v256
        %vm258 = vweird.f32 %v252
        %vm259 = vweird.f32 %v253
        %vm260 = vmor %vm258, %vm259
        %v261 = vsel %vm260, %v253, %v257
        %v262 = vand.u32 2147483647, %v252
        %vm263 = vcmp.eq.f32.partialorder %v262, 8.507059e+37
        %v264 = vand.u32 %v252, 2147483648
        %v265 = vor.u32 1.1754944e-38, %v264
        %v266 = vsel %vm263, %v265, %v261
        %v267 = vmul.f32 %v251, %v266
        %v268 = vadd.f32 %v251, 1.0
        %v269 = vlog2.pop %v268
        %v270 = vmul.f32 %v269, 0.6931472
        %v271 = vmul.f32 -0.5, %v251
        %v272 = vadd.f32 %v271, 1.0
        %v273 = vmul.f32 %v272, %v251
        %v274 = vand.u32 2147483647, %v251
        %vm275 = vcmp.lt.f32.partialorder %v274, 0.0004427343
        %v276 = vsel %vm275, %v273, %v270
        %v277 = vmul.f32 %v230, %v249
        %v278 = vsub.f32 %v276, %v277
        %v279 = vmul.f32 %v267, %v230
        %v280 = vld [vmem:[%s217] sm:$0xff]
        %v281 = vadd.f32 %v279, 0.0
        %v282 = vadd.f32 %v280, %v281
        %283 = vst [vmem:[%s217] sm:$0xff] %v282
        %s284 = scalar_lea.vmem %s217, 8 [#allocation7]
        %v285 = vld [vmem:[%s284] sm:$0xff]
        %v286 = vadd.f32 %v267, 0.0
        %v287 = vadd.f32 %v285, %v286
        %288 = vst [vmem:[%s284] sm:$0xff] %v287
        %s289 = scalar_lea.vmem %s217, 16 [#allocation7]
        %v290 = vld [vmem:[%s289] sm:$0xff]
        %v291 = vadd.f32 %v230, 0.0
        %v292 = vadd.f32 %v290, %v291
        %293 = vst [vmem:[%s289] sm:$0xff] %v292
        %s294 = scalar_lea.vmem %s217, 24 [#allocation7]
        %v295 = vld [vmem:[%s294] sm:$0xff]
        %v296 = vadd.f32 %v278, 0.0
        %v297 = vadd.f32 %v295, %v296
        %298 = vst [vmem:[%s294] sm:$0xff] %v297
        %s299 = sand.u32 %s98, 1
        %s300 = scalar_lea.sflag [#allocation4], %s299
        %s301 = sand.u32 %s98, 1
        %s302 = smul.addr %s301, 32
        %s303 = scalar_lea.vmem [#allocation7], %s302
        // Predicated region
        $region41: #{tpu_custom_call.1} parent=27 // pred_check
          %p304 = pneg %p108
        $region42: #{tpu_custom_call.1} parent=27 // pred_check_branch
          %306 = sbr.rel (%p304) target = $region44
        $region43: #{tpu_custom_call.1} parent=27 // pred_region
          %s307 = smul.u32 4, %s26
          %309 = vsyncadd %s300, 0
          %s310 = smul.addr %s307, 8
          %s311 = scalar_lea.hbm %s2, %s310
          %s312 = sshll.u32 %s303, 4
          %s313 = int_to_ptr.vmem [resolvable:$true] %s312
          %s314 = sshll.u32 %s311, 4
          %s315 = int_to_ptr.hbm [resolvable:$true] %s314
          %320 = dma.vmem_to_hbm [thread:$0]  %s313, 512, %s315, %s300, 128, 128, 8
        $region44: #{tpu_custom_call.1} parent=27 // pred_fallthru
          _
      $region28: #{tpu_custom_call.1} parent=5 // pred_fallthru
        _
      %p321 = scmp.le.s32.totalorder 2, %s17
      // Predicated region
      $region45: #{tpu_custom_call.1} parent=5 // pred_check
        %p322 = pneg %p321
      $region46: #{tpu_custom_call.1} parent=5 // pred_check_branch
        %324 = sbr.rel (%p322) target = $region48
      $region47: #{tpu_custom_call.1} parent=5 // pred_region
        %s325 = ssub.s32 %s17, 2
        // Predicated region
        $region49: #{tpu_custom_call.1} parent=47 // pred_check
          %p326 = pneg %p114
        $region50: #{tpu_custom_call.1} parent=47 // pred_check_branch
          %328 = sbr.rel (%p326) target = $region52
        $region51: #{tpu_custom_call.1} parent=47 // pred_region
          %s329 = sand.u32 %s99, 1
          %s330 = scalar_lea.sflag [#allocation4], %s329
          %s331 = sand.u32 %s99, 1
          %s332 = smul.addr %s331, 32
          %s333 = scalar_lea.vmem [#allocation7], %s332
          %335 = dma.done %s330, 512
        $region52: #{tpu_custom_call.1} parent=47 // pred_fallthru
          _
      $region48: #{tpu_custom_call.1} parent=5 // pred_fallthru
        _
    $region6: #{tpu_custom_call.1} parent=1 // loop_footer
      %s21 = sadd.s32 1, %s17
    $region7: #{tpu_custom_call.1} parent=1 // loop_footer_branch
      %16 = sbr.rel target = $region3
    $region8: #{tpu_custom_call.1} parent=1 // loop_exit
      _
    %336 = vsyncpa [#allocation3], 1
    %s337 = scalar_lea.sflag [#allocation3], 1
    %338 = vsyncpa %s337, 1
    %339 = vsyncpa [#allocation6], 1
    %s340 = scalar_lea.sflag [#allocation6], 1
    %341 = vsyncpa %s340, 1
    %342 = vsyncpa [#allocation4], 1
    %s343 = scalar_lea.sflag [#allocation4], 1
    %344 = vsyncpa %s343, 1

</llo_original>
